<compile_context>
chip_gen: v5e
topology: v5e:2x2
jax: 0.10.0
libtpu: 0.0.40
codegen_flags: <defaults>
</compile_context>

<pallas_src>
import jax
import jax.numpy as jnp
from jax.experimental import pallas as pl
from jax.experimental.pallas import tpu as pltpu


def _pick_row_tile(H, W):
    # Small images: one row tile per image (no halo recompute, minimal grid
    # overhead).  Large images: bounded working set, lane-dense output block.
    if H * W <= 32 * 1024:
        return H
    for th in (32, 16, 8, 4):
        if H % th == 0 and (th * W) % 128 == 0:
            return th
    return H


def double_conv_fused(x_flat, w1, b1, w2, b2, *, H, W, row_tile=None):
    """Fused (conv3x3 + folded-BN + ReLU) x2, channels-first, spatial in lanes.

    x_flat: (N, Cin, H*W) bf16
    w1:     (C, 9*Cin)    bf16   conv1 weight, BN1 scale folded, layout [kh][kw][ci]
    b1:     (C, 1)        f32    folded BN1 bias
    w2:     (C, 9*C)      bf16   conv2 weight, BN2 scale folded
    b2:     (C, 1)        f32    folded BN2 bias
    returns (N, C, H*W)   f32
    """
    N, Cin, HW = x_flat.shape
    assert HW == H * W
    C = w1.shape[0]

    TH = row_tile if row_tile is not None else _pick_row_tile(H, W)
    if H % TH != 0 or (TH != H and (TH * W) % 128 != 0):
        TH = H
    nI = H // TH
    HP = TH + 2                  # conv1 rows needed per tile (incl. conv2 halo)
    SLAB = (TH + 4) * W          # padded-input rows needed per tile, flattened

    def kernel(x_ref, w1_ref, b1_ref, w2_ref, b2_ref, ml_ref, mr_ref,
               o_ref, xex_ref):
        i = pl.program_id(1)
        bf = jnp.bfloat16

        # ---- once per image: build dx-expanded, row-padded input slabs -----
        # xex_ref[t] holds, for row tile t, padded-image rows
        # [t*TH, t*TH + TH + 4)  (image row = padded row - 2), with the three
        # column-shifted copies (kw = 0, 1, 2) stacked along the channel axis.
        # NOTE: relies on grid order n-outer / i-inner and on megacore only
        # splitting the declared "parallel" (batch) axis; the i axis must stay
        # "arbitrary".
        @pl.when(i == 0)
        def _build():
            x0 = x_ref[0]                                        # (Cin, H*W)
            ml = ml_ref[:, :H * W]
            mr = mr_ref[:, :H * W]
            zc = jnp.zeros((Cin, 1), bf)
            # kw=0 copy reads column w-1 (zero at w==0); kw=2 reads w+1.
            x_k0 = jnp.concatenate([zc, x0[:, :H * W - 1]], axis=1) * ml
            x_k2 = jnp.concatenate([x0[:, 1:], zc], axis=1) * mr
            x_k = jnp.concatenate([x_k0, x0, x_k2], axis=0)      # (3Cin, H*W)
            zrow = jnp.zeros((3 * Cin, 2 * W), bf)
            for t in range(nI):                 # static, unrolled at trace time
                a = max(0, t * TH - 2)          # first image row in this slab
                bot = min(H, t * TH + TH + 2)   # one past the last image row
                lo = (a - (t * TH - 2)) * W
                hi = (bot - (t * TH - 2)) * W
                if lo > 0:                      # top halo rows (first tile)
                    xex_ref[t, :, 0:lo] = zrow[:, 0:lo]
                if hi < SLAB:                   # bottom halo rows (last tile)
                    xex_ref[t, :, hi:SLAB] = zrow[:, 0:SLAB - hi]
                xex_ref[t, :, lo:hi] = x_k[:, a * W:bot * W]

        # ---- stage 1: conv1 (+ folded BN1) + ReLU on HP = TH+2 rows --------
        slab = xex_ref[i]                                        # (3Cin, SLAB)
        w1v = w1_ref[...]
        acc1 = jnp.dot(w1v[:, 0:3 * Cin], slab[:, 0:HP * W],
                       preferred_element_type=jnp.float32)
        acc1 += jnp.dot(w1v[:, 3 * Cin:6 * Cin], slab[:, W:W + HP * W],
                        preferred_element_type=jnp.float32)
        acc1 += jnp.dot(w1v[:, 6 * Cin:9 * Cin], slab[:, 2 * W:2 * W + HP * W],
                        preferred_element_type=jnp.float32)
        y1 = jnp.maximum(acc1 + b1_ref[...], 0.0)                # (C, HP*W) f32

        # conv1 "rows" outside the image are conv2's zero padding.
        r0 = i * TH
        lane = jax.lax.broadcasted_iota(jnp.int32, (1, HP * W), 1)
        keep = (lane >= (1 - r0) * W) & (lane < (H + 1 - r0) * W)
        y1 = jnp.where(keep, y1, 0.0)
        y1b = y1.astype(bf)

        # ---- dx-expand the intermediate (kw = 0,1,2 copies, column masked) -
        zcc = jnp.zeros((C, 1), bf)
        mlh = ml_ref[:, :HP * W]
        mrh = mr_ref[:, :HP * W]
        m_k0 = jnp.concatenate([zcc, y1b[:, :HP * W - 1]], axis=1) * mlh
        m_k2 = jnp.concatenate([y1b[:, 1:], zcc], axis=1) * mrh
        mid = jnp.concatenate([m_k0, y1b, m_k2], axis=0)         # (3C, HP*W)

        # ---- stage 2: conv2 (+ folded BN2) + ReLU on TH output rows --------
        w2v = w2_ref[...]
        acc2 = jnp.dot(w2v[:, 0:3 * C], mid[:, 0:TH * W],
                       preferred_element_type=jnp.float32)
        acc2 += jnp.dot(w2v[:, 3 * C:6 * C], mid[:, W:W + TH * W],
                        preferred_element_type=jnp.float32)
        acc2 += jnp.dot(w2v[:, 6 * C:9 * C], mid[:, 2 * W:2 * W + TH * W],
                        preferred_element_type=jnp.float32)
        y2 = jnp.maximum(acc2 + b2_ref[...], 0.0)                # (C, TH*W) f32
        o_ref[0] = y2.astype(o_ref.dtype)

    # Column-validity masks (1.0 where the shifted column stays inside [0, W)),
    # over flattened spatial lanes; long enough to cover both H*W and HP*W.
    wpos = jnp.arange((H + 2) * W, dtype=jnp.int32) % W
    ml = (wpos > 0).astype(jnp.bfloat16).reshape(1, (H + 2) * W)
    mr = (wpos < W - 1).astype(jnp.bfloat16).reshape(1, (H + 2) * W)

    flops = 2 * N * H * W * 9 * (Cin * C + C * C)
    bytes_accessed = int(x_flat.size * 2 + (w1.size + w2.size) * 2
                         + (b1.size + b2.size) * 4 + N * C * H * W * 4)

    return pl.pallas_call(
        kernel,
        out_shape=jax.ShapeDtypeStruct((N, C, H * W), jnp.float32),
        grid_spec=pltpu.PrefetchScalarGridSpec(
            num_scalar_prefetch=0,
            grid=(N, nI),
            in_specs=[
                # whole image per n; constant over i => stays resident in VMEM
                pl.BlockSpec((1, Cin, H * W), lambda n, i: (n, 0, 0)),
                pl.BlockSpec((C, 9 * Cin), lambda n, i: (0, 0)),
                pl.BlockSpec((C, 1), lambda n, i: (0, 0)),
                pl.BlockSpec((C, 9 * C), lambda n, i: (0, 0)),
                pl.BlockSpec((C, 1), lambda n, i: (0, 0)),
                pl.BlockSpec((1, (H + 2) * W), lambda n, i: (0, 0)),
                pl.BlockSpec((1, (H + 2) * W), lambda n, i: (0, 0)),
            ],
            out_specs=pl.BlockSpec((1, C, TH * W), lambda n, i: (n, 0, i)),
            scratch_shapes=[
                # per-row-tile, dx-expanded, row-padded bf16 input slabs
                pltpu.VMEM((nI, 3 * Cin, SLAB), jnp.bfloat16),
            ],
        ),
        compiler_params=pltpu.CompilerParams(
            dimension_semantics=("parallel", "arbitrary"),
            vmem_limit_bytes=32 * 1024 * 1024,
        ),
        cost_estimate=pl.CostEstimate(
            flops=flops, transcendentals=0, bytes_accessed=bytes_accessed),
    )(x_flat, w1, b1, w2, b2, ml, mr)


# ----------------------------- parameter prep --------------------------------

def fold_double_conv_params(raw, eps=1e-5):
    """Fold eval-mode BN into the conv weights; emit kernel-ready operands."""
    def fold(w_oihw, bn):
        cout, cin = w_oihw.shape[0], w_oihw.shape[1]
        scale = bn['gamma'] / jnp.sqrt(bn['var'] + eps)            # (Cout,)
        bias = bn['beta'] - bn['mean'] * scale                     # (Cout,)
        # kernel layout: w_flat[o, kh*3*cin + kw*cin + ci]
        w_flat = jnp.transpose(w_oihw, (0, 2, 3, 1)).reshape(cout, 9 * cin)
        w_flat = (w_flat * scale[:, None]).astype(jnp.bfloat16)
        return w_flat, bias.reshape(cout, 1).astype(jnp.float32)

    w1, b1 = fold(raw['w1'], raw['bn1'])
    w2, b2 = fold(raw['w2'], raw['bn2'])
    return dict(w1=w1, b1=b1, w2=w2, b2=b2)


def make_raw_params(key, in_ch, out_ch):
    """Deterministic synthetic parameters matching the PyTorch module's shapes."""
    ks = jax.random.split(key, 4)

    def bn(k, c):
        kg, kb, km, kv = jax.random.split(k, 4)
        return dict(
            gamma=1.0 + 0.1 * jax.random.normal(kg, (c,), jnp.float32),
            beta=0.1 * jax.random.normal(kb, (c,), jnp.float32),
            mean=0.1 * jax.random.normal(km, (c,), jnp.float32),
            var=jnp.abs(jax.random.normal(kv, (c,), jnp.float32)) + 0.5,
        )

    w1 = 0.1 * jax.random.normal(ks[0], (out_ch, in_ch, 3, 3), jnp.float32)
    w2 = 0.1 * jax.random.normal(ks[1], (out_ch, out_ch, 3, 3), jnp.float32)
    return dict(w1=w1, bn1=bn(ks[2], out_ch), w2=w2, bn2=bn(ks[3], out_ch))


# ------------------------------- forward pass --------------------------------

@jax.jit
def inconv_forward(x_nchw, params):
    """PyTorch-compatible interface: NCHW in, NCHW out (no transposes needed)."""
    N, Cin, H, W = x_nchw.shape
    C = params['w1'].shape[0]
    x = x_nchw.astype(jnp.bfloat16).reshape(N, Cin, H * W)
    y = double_conv_fused(x, params['w1'], params['b1'],
                          params['w2'], params['b2'], H=H, W=W)
    return y.reshape(N, C, H, W)


def _reference_forward(x_nchw, raw, eps=1e-5):
    """Pure-JAX f32 reference (lax conv) for correctness checking."""
    x = jnp.transpose(x_nchw, (0, 2, 3, 1))

    def block(x, w_oihw, bn):
        w = jnp.transpose(w_oihw, (2, 3, 1, 0))
        y = jax.lax.conv_general_dilated(
            x, w, window_strides=(1, 1), padding='SAME',
            dimension_numbers=('NHWC', 'HWIO', 'NHWC'))
        scale = bn['gamma'] / jnp.sqrt(bn['var'] + eps)
        bias = bn['beta'] - bn['mean'] * scale
        return jnp.maximum(y * scale + bias, 0.0)

    y = block(x, raw['w1'], raw['bn1'])
    y = block(y, raw['w2'], raw['bn2'])
    return jnp.transpose(y, (0, 3, 1, 2))


if __name__ == "__main__":
    key = jax.random.PRNGKey(0)
    k_x, k_p = jax.random.split(key)

    N, Cin, H, W = 2, 4, 16, 16
    Cout = 8
    x = jax.random.normal(k_x, (N, Cin, H, W), jnp.float32)
    raw = make_raw_params(k_p, Cin, Cout)
    params = fold_double_conv_params(raw)

    out = jax.block_until_ready(inconv_forward(x, params))
    ref = _reference_forward(x, raw)

    assert out.shape == (N, Cout, H, W), out.shape
    max_err = float(jnp.max(jnp.abs(out - ref)))
    # bf16 MXU operands vs. a pure-f32 reference -> loose but bug-catching tol.
    assert jnp.allclose(out, ref, atol=5e-2, rtol=5e-2), f"mismatch, max|err|={max_err}"

    print("KERNEL_OK")
</pallas_src>

<mosaic_0001>
module attributes {stable_mosaic.version = 11 : i64} {
  func.func @kernel(%arg0: i32, %arg1: i32, %arg2: memref<1x4x256xbf16, #tpu.memory_space<vmem>>, %arg3: memref<8x36xbf16, #tpu.memory_space<vmem>>, %arg4: memref<8x1xf32, #tpu.memory_space<vmem>>, %arg5: memref<8x72xbf16, #tpu.memory_space<vmem>>, %arg6: memref<8x1xf32, #tpu.memory_space<vmem>>, %arg7: memref<1x288xbf16, #tpu.memory_space<vmem>>, %arg8: memref<1x288xbf16, #tpu.memory_space<vmem>>, %arg9: memref<1x8x256xf32, #tpu.memory_space<vmem>>, %arg10: memref<1x12x320xbf16, #tpu.memory_space<vmem>>) attributes {dimension_semantics = [#tpu.dimension_semantics<parallel>, #tpu.dimension_semantics<arbitrary>], iteration_bounds = array<i64: 2, 1>, scalar_prefetch = 0 : i64, scratch_operands = 1 : i64, tpu.core_type = #tpu.core_type<tc>, window_params = [{transform_indices = @transform_0, window_bounds = array<i64: 1, 4, 256>}, {pipeline_mode = #tpu.pipeline_mode<synchronous>, transform_indices = @transform_1, window_bounds = array<i64: 8, 36>}, {pipeline_mode = #tpu.pipeline_mode<synchronous>, transform_indices = @transform_2, window_bounds = array<i64: 8, 1>}, {pipeline_mode = #tpu.pipeline_mode<synchronous>, transform_indices = @transform_3, window_bounds = array<i64: 8, 72>}, {pipeline_mode = #tpu.pipeline_mode<synchronous>, transform_indices = @transform_4, window_bounds = array<i64: 8, 1>}, {pipeline_mode = #tpu.pipeline_mode<synchronous>, transform_indices = @transform_5, window_bounds = array<i64: 1, 288>}, {pipeline_mode = #tpu.pipeline_mode<synchronous>, transform_indices = @transform_6, window_bounds = array<i64: 1, 288>}, {transform_indices = @transform_7, window_bounds = array<i64: 1, 8, 256>}]} {
    %c0_i32 = arith.constant 0 : i32
    %0 = arith.cmpi eq, %arg1, %c0_i32 : i32
    %1 = arith.extui %0 : i1 to i32
    %c0_i32_0 = arith.constant 0 : i32
    %2 = arith.cmpi ne, %1, %c0_i32_0 : i32
    scf.if %2 {
      %c0_28 = arith.constant 0 : index
      %c0_29 = arith.constant 0 : index
      %c0_30 = arith.constant 0 : index
      %71 = vector.load %arg2[%c0_28, %c0_29, %c0_30] : memref<1x4x256xbf16, #tpu.memory_space<vmem>>, vector<1x4x256xbf16>
      %72 = vector.shape_cast %71 : vector<1x4x256xbf16> to vector<4x256xbf16>
      %c0_31 = arith.constant 0 : index
      %c0_32 = arith.constant 0 : index
      %73 = vector.load %arg7[%c0_31, %c0_32] : memref<1x288xbf16, #tpu.memory_space<vmem>>, vector<1x256xbf16>
      %c0_33 = arith.constant 0 : index
      %c0_34 = arith.constant 0 : index
      %74 = vector.load %arg8[%c0_33, %c0_34] : memref<1x288xbf16, #tpu.memory_space<vmem>>, vector<1x256xbf16>
      %cst_35 = arith.constant 0.000000e+00 : bf16
      %75 = vector.broadcast %cst_35 : bf16 to vector<4x1xbf16>
      %76 = vector.extract_strided_slice %72 {offsets = [0, 0], sizes = [4, 255], strides = [1, 1]} : vector<4x256xbf16> to vector<4x255xbf16>
      %77 = tpu.concatenate %75, %76 in 1 : vector<4x1xbf16>, vector<4x255xbf16> -> vector<4x256xbf16>
      %78 = vector.broadcast %73 : vector<1x256xbf16> to vector<4x256xbf16>
      %79 = arith.mulf %77, %78 : vector<4x256xbf16>
      %80 = vector.extract_strided_slice %72 {offsets = [0, 1], sizes = [4, 255], strides = [1, 1]} : vector<4x256xbf16> to vector<4x255xbf16>
      %81 = tpu.concatenate %80, %75 in 1 : vector<4x255xbf16>, vector<4x1xbf16> -> vector<4x256xbf16>
      %82 = vector.broadcast %74 : vector<1x256xbf16> to vector<4x256xbf16>
      %83 = arith.mulf %81, %82 : vector<4x256xbf16>
      %84 = tpu.concatenate %79, %72, %83 in 0 : vector<4x256xbf16>, vector<4x256xbf16>, vector<4x256xbf16> -> vector<12x256xbf16>
      %cst_36 = arith.constant 0.000000e+00 : bf16
      %85 = vector.broadcast %cst_36 : bf16 to vector<12x32xbf16>
      %c0_37 = arith.constant 0 : index
      %c0_38 = arith.constant 0 : index
      %c0_39 = arith.constant 0 : index
      %86 = vector.load %arg10[%c0_37, %c0_38, %c0_39] : memref<1x12x320xbf16, #tpu.memory_space<vmem>>, vector<1x12x32xbf16>
      %87 = vector.shape_cast %86 : vector<1x12x32xbf16> to vector<12x32xbf16>
      %88 = vector.shape_cast %85 : vector<12x32xbf16> to vector<1x12x32xbf16>
      tpu.vector_store %arg10[%c0_37, %c0_38, %c0_39], %88 {strides = array<i32>} : memref<1x12x320xbf16, #tpu.memory_space<vmem>>, vector<1x12x32xbf16>,
      %c0_40 = arith.constant 0 : index
      %c0_41 = arith.constant 0 : index
      %c288 = arith.constant 288 : index
      %89 = vector.load %arg10[%c0_40, %c0_41, %c288] : memref<1x12x320xbf16, #tpu.memory_space<vmem>>, vector<1x12x32xbf16>
      %90 = vector.shape_cast %89 : vector<1x12x32xbf16> to vector<12x32xbf16>
      %91 = vector.shape_cast %85 : vector<12x32xbf16> to vector<1x12x32xbf16>
      tpu.vector_store %arg10[%c0_40, %c0_41, %c288], %91 {strides = array<i32>} : memref<1x12x320xbf16, #tpu.memory_space<vmem>>, vector<1x12x32xbf16>,
      %c0_42 = arith.constant 0 : index
      %c0_43 = arith.constant 0 : index
      %c32 = arith.constant 32 : index
      %92 = vector.load %arg10[%c0_42, %c0_43, %c32] : memref<1x12x320xbf16, #tpu.memory_space<vmem>>, vector<1x12x256xbf16>
      %93 = vector.shape_cast %92 : vector<1x12x256xbf16> to vector<12x256xbf16>
      %94 = vector.shape_cast %84 : vector<12x256xbf16> to vector<1x12x256xbf16>
      tpu.vector_store %arg10[%c0_42, %c0_43, %c32], %94 {strides = array<i32>} : memref<1x12x320xbf16, #tpu.memory_space<vmem>>, vector<1x12x256xbf16>,
    } else {
    }
    %3 = arith.index_cast %arg1 : i32 to index
    %c0 = arith.constant 0 : index
    %c0_1 = arith.constant 0 : index
    %4 = vector.load %arg10[%3, %c0, %c0_1] : memref<1x12x320xbf16, #tpu.memory_space<vmem>>, vector<1x12x320xbf16>
    %5 = vector.shape_cast %4 : vector<1x12x320xbf16> to vector<12x320xbf16>
    %c0_2 = arith.constant 0 : index
    %c0_3 = arith.constant 0 : index
    %6 = vector.load %arg3[%c0_2, %c0_3] : memref<8x36xbf16, #tpu.memory_space<vmem>>, vector<8x36xbf16>
    %7 = vector.extract_strided_slice %6 {offsets = [0, 0], sizes = [8, 12], strides = [1, 1]} : vector<8x36xbf16> to vector<8x12xbf16>
    %8 = vector.extract_strided_slice %5 {offsets = [0, 0], sizes = [12, 288], strides = [1, 1]} : vector<12x320xbf16> to vector<12x288xbf16>
    %cst = arith.constant dense<0.000000e+00> : vector<8x288xf32>
    %9 = tpu.matmul %7, %8, %cst {dimension_numbers = #tpu.dot_dimension_numbers<[1], [0], [0], [1], [0, 0, 1, 1], [], []>} : vector<8x12xbf16>, vector<12x288xbf16>, vector<8x288xf32> -> vector<8x288xf32>
    %10 = vector.extract_strided_slice %6 {offsets = [0, 12], sizes = [8, 12], strides = [1, 1]} : vector<8x36xbf16> to vector<8x12xbf16>
    %11 = vector.extract_strided_slice %5 {offsets = [0, 16], sizes = [12, 288], strides = [1, 1]} : vector<12x320xbf16> to vector<12x288xbf16>
    %cst_4 = arith.constant dense<0.000000e+00> : vector<8x288xf32>
    %12 = tpu.matmul %10, %11, %cst_4 {dimension_numbers = #tpu.dot_dimension_numbers<[1], [0], [0], [1], [0, 0, 1, 1], [], []>} : vector<8x12xbf16>, vector<12x288xbf16>, vector<8x288xf32> -> vector<8x288xf32>
    %13 = arith.addf %9, %12 : vector<8x288xf32>
    %14 = vector.extract_strided_slice %6 {offsets = [0, 24], sizes = [8, 12], strides = [1, 1]} : vector<8x36xbf16> to vector<8x12xbf16>
    %15 = vector.extract_strided_slice %5 {offsets = [0, 32], sizes = [12, 288], strides = [1, 1]} : vector<12x320xbf16> to vector<12x288xbf16>
    %cst_5 = arith.constant dense<0.000000e+00> : vector<8x288xf32>
    %16 = tpu.matmul %14, %15, %cst_5 {dimension_numbers = #tpu.dot_dimension_numbers<[1], [0], [0], [1], [0, 0, 1, 1], [], []>} : vector<8x12xbf16>, vector<12x288xbf16>, vector<8x288xf32> -> vector<8x288xf32>
    %17 = arith.addf %13, %16 : vector<8x288xf32>
    %c0_6 = arith.constant 0 : index
    %c0_7 = arith.constant 0 : index
    %18 = vector.load %arg4[%c0_6, %c0_7] : memref<8x1xf32, #tpu.memory_space<vmem>>, vector<8x1xf32>
    %19 = vector.broadcast %18 : vector<8x1xf32> to vector<8x288xf32>
    %20 = arith.addf %17, %19 : vector<8x288xf32>
    %cst_8 = arith.constant 0.000000e+00 : f32
    %21 = vector.broadcast %cst_8 : f32 to vector<8x288xf32>
    %22 = arith.maximumf %20, %21 : vector<8x288xf32>
    %c16_i32 = arith.constant 16 : i32
    %23 = arith.muli %arg1, %c16_i32 : i32
    %24 = tpu.iota {dimensions = array<i32: 1>} : vector<1x288xi32>
    %c1_i32 = arith.constant 1 : i32
    %25 = arith.subi %c1_i32, %23 : i32
    %c16_i32_9 = arith.constant 16 : i32
    %26 = arith.muli %25, %c16_i32_9 : i32
    %27 = vector.broadcast %26 : i32 to vector<1x288xi32>
    %28 = arith.cmpi sge, %24, %27 : vector<1x288xi32>
    %c17_i32 = arith.constant 17 : i32
    %29 = arith.subi %c17_i32, %23 : i32
    %c16_i32_10 = arith.constant 16 : i32
    %30 = arith.muli %29, %c16_i32_10 : i32
    %31 = vector.broadcast %30 : i32 to vector<1x288xi32>
    %32 = arith.cmpi slt, %24, %31 : vector<1x288xi32>
    %33 = arith.andi %28, %32 : vector<1x288xi1>
    %cst_11 = arith.constant 0.000000e+00 : f32
    %34 = vector.shape_cast %33 : vector<1x288xi1> to vector<1x288xi1>
    %35 = vector.broadcast %34 : vector<1x288xi1> to vector<8x288xi1>
    %36 = vector.broadcast %cst_11 : f32 to vector<8x288xf32>
    %37 = arith.select %35, %22, %36 : vector<8x288xi1>, vector<8x288xf32>
    %38 = arith.truncf %37 : vector<8x288xf32> to vector<8x288xbf16>
    %cst_12 = arith.constant 0.000000e+00 : bf16
    %39 = vector.broadcast %cst_12 : bf16 to vector<8x1xbf16>
    %c0_13 = arith.constant 0 : index
    %c0_14 = arith.constant 0 : index
    %40 = vector.load %arg7[%c0_13, %c0_14] : memref<1x288xbf16, #tpu.memory_space<vmem>>, vector<1x288xbf16>
    %c0_15 = arith.constant 0 : index
    %c0_16 = arith.constant 0 : index
    %41 = vector.load %arg8[%c0_15, %c0_16] : memref<1x288xbf16, #tpu.memory_space<vmem>>, vector<1x288xbf16>
    %42 = vector.extract_strided_slice %38 {offsets = [0, 0], sizes = [8, 287], strides = [1, 1]} : vector<8x288xbf16> to vector<8x287xbf16>
    %43 = tpu.concatenate %39, %42 in 1 : vector<8x1xbf16>, vector<8x287xbf16> -> vector<8x288xbf16>
    %44 = vector.broadcast %40 : vector<1x288xbf16> to vector<8x288xbf16>
    %45 = arith.mulf %43, %44 : vector<8x288xbf16>
    %46 = vector.extract_strided_slice %38 {offsets = [0, 1], sizes = [8, 287], strides = [1, 1]} : vector<8x288xbf16> to vector<8x287xbf16>
    %47 = tpu.concatenate %46, %39 in 1 : vector<8x287xbf16>, vector<8x1xbf16> -> vector<8x288xbf16>
    %48 = vector.broadcast %41 : vector<1x288xbf16> to vector<8x288xbf16>
    %49 = arith.mulf %47, %48 : vector<8x288xbf16>
    %50 = tpu.concatenate %45, %38, %49 in 0 : vector<8x288xbf16>, vector<8x288xbf16>, vector<8x288xbf16> -> vector<24x288xbf16>
    %c0_17 = arith.constant 0 : index
    %c0_18 = arith.constant 0 : index
    %51 = vector.load %arg5[%c0_17, %c0_18] : memref<8x72xbf16, #tpu.memory_space<vmem>>, vector<8x72xbf16>
    %52 = vector.extract_strided_slice %51 {offsets = [0, 0], sizes = [8, 24], strides = [1, 1]} : vector<8x72xbf16> to vector<8x24xbf16>
    %53 = vector.extract_strided_slice %50 {offsets = [0, 0], sizes = [24, 256], strides = [1, 1]} : vector<24x288xbf16> to vector<24x256xbf16>
    %cst_19 = arith.constant dense<0.000000e+00> : vector<8x256xf32>
    %54 = tpu.matmul %52, %53, %cst_19 {dimension_numbers = #tpu.dot_dimension_numbers<[1], [0], [0], [1], [0, 0, 1, 1], [], []>} : vector<8x24xbf16>, vector<24x256xbf16>, vector<8x256xf32> -> vector<8x256xf32>
    %55 = vector.extract_strided_slice %51 {offsets = [0, 24], sizes = [8, 24], strides = [1, 1]} : vector<8x72xbf16> to vector<8x24xbf16>
    %56 = vector.extract_strided_slice %50 {offsets = [0, 16], sizes = [24, 256], strides = [1, 1]} : vector<24x288xbf16> to vector<24x256xbf16>
    %cst_20 = arith.constant dense<0.000000e+00> : vector<8x256xf32>
    %57 = tpu.matmul %55, %56, %cst_20 {dimension_numbers = #tpu.dot_dimension_numbers<[1], [0], [0], [1], [0, 0, 1, 1], [], []>} : vector<8x24xbf16>, vector<24x256xbf16>, vector<8x256xf32> -> vector<8x256xf32>
    %58 = arith.addf %54, %57 : vector<8x256xf32>
    %59 = vector.extract_strided_slice %51 {offsets = [0, 48], sizes = [8, 24], strides = [1, 1]} : vector<8x72xbf16> to vector<8x24xbf16>
    %60 = vector.extract_strided_slice %50 {offsets = [0, 32], sizes = [24, 256], strides = [1, 1]} : vector<24x288xbf16> to vector<24x256xbf16>
    %cst_21 = arith.constant dense<0.000000e+00> : vector<8x256xf32>
    %61 = tpu.matmul %59, %60, %cst_21 {dimension_numbers = #tpu.dot_dimension_numbers<[1], [0], [0], [1], [0, 0, 1, 1], [], []>} : vector<8x24xbf16>, vector<24x256xbf16>, vector<8x256xf32> -> vector<8x256xf32>
    %62 = arith.addf %58, %61 : vector<8x256xf32>
    %c0_22 = arith.constant 0 : index
    %c0_23 = arith.constant 0 : index
    %63 = vector.load %arg6[%c0_22, %c0_23] : memref<8x1xf32, #tpu.memory_space<vmem>>, vector<8x1xf32>
    %64 = vector.broadcast %63 : vector<8x1xf32> to vector<8x256xf32>
    %65 = arith.addf %62, %64 : vector<8x256xf32>
    %cst_24 = arith.constant 0.000000e+00 : f32
    %66 = vector.broadcast %cst_24 : f32 to vector<8x256xf32>
    %67 = arith.maximumf %65, %66 : vector<8x256xf32>
    %c0_25 = arith.constant 0 : index
    %c0_26 = arith.constant 0 : index
    %c0_27 = arith.constant 0 : index
    %68 = vector.load %arg9[%c0_25, %c0_26, %c0_27] : memref<1x8x256xf32, #tpu.memory_space<vmem>>, vector<1x8x256xf32>
    %69 = vector.shape_cast %68 : vector<1x8x256xf32> to vector<8x256xf32>
    %70 = vector.shape_cast %67 : vector<8x256xf32> to vector<1x8x256xf32>
    tpu.vector_store %arg9[%c0_25, %c0_26, %c0_27], %70 {strides = array<i32>} : memref<1x8x256xf32, #tpu.memory_space<vmem>>, vector<1x8x256xf32>,
    return
  }
  func.func @transform_0(%arg0: i32, %arg1: i32) -> (i32, i32, i32) {
    %c0_i32 = arith.constant 0 : i32
    %c0_i32_0 = arith.constant 0 : i32
    %c0_i32_1 = arith.constant 0 : i32
    return %arg0, %c0_i32, %c0_i32_0 : i32, i32, i32
  }
  func.func @transform_1(%arg0: i32, %arg1: i32) -> (i32, i32) {
    %c0_i32 = arith.constant 0 : i32
    %c0_i32_0 = arith.constant 0 : i32
    %c0_i32_1 = arith.constant 0 : i32
    return %c0_i32, %c0_i32_0 : i32, i32
  }
  func.func @transform_2(%arg0: i32, %arg1: i32) -> (i32, i32) {
    %c0_i32 = arith.constant 0 : i32
    %c0_i32_0 = arith.constant 0 : i32
    %c0_i32_1 = arith.constant 0 : i32
    return %c0_i32, %c0_i32_0 : i32, i32
  }
  func.func @transform_3(%arg0: i32, %arg1: i32) -> (i32, i32) {
    %c0_i32 = arith.constant 0 : i32
    %c0_i32_0 = arith.constant 0 : i32
    %c0_i32_1 = arith.constant 0 : i32
    return %c0_i32, %c0_i32_0 : i32, i32
  }
  func.func @transform_4(%arg0: i32, %arg1: i32) -> (i32, i32) {
    %c0_i32 = arith.constant 0 : i32
    %c0_i32_0 = arith.constant 0 : i32
    %c0_i32_1 = arith.constant 0 : i32
    return %c0_i32, %c0_i32_0 : i32, i32
  }
  func.func @transform_5(%arg0: i32, %arg1: i32) -> (i32, i32) {
    %c0_i32 = arith.constant 0 : i32
    %c0_i32_0 = arith.constant 0 : i32
    %c0_i32_1 = arith.constant 0 : i32
    return %c0_i32, %c0_i32_0 : i32, i32
  }
  func.func @transform_6(%arg0: i32, %arg1: i32) -> (i32, i32) {
    %c0_i32 = arith.constant 0 : i32
    %c0_i32_0 = arith.constant 0 : i32
    %c0_i32_1 = arith.constant 0 : i32
    return %c0_i32, %c0_i32_0 : i32, i32
  }
  func.func @transform_7(%arg0: i32, %arg1: i32) -> (i32, i32, i32) {
    %c0_i32 = arith.constant 0 : i32
    %c0_i32_0 = arith.constant 0 : i32
    return %arg0, %c0_i32, %arg1 : i32, i32, i32
  }
}

</mosaic_0001>

<llo_original>
// kernel: inconv_forward.1
$region0: #{inconv_forward.1}
  #allocation0 [shape = 'u32[]', space=smem, size = 0x4, offset = 0x4, fixed_abs, tag = 'smem constant byte address 0x4 - core index']
  #allocation1 [shape = 'u32[72,128]{1,0:T(1,128)}', space=vmem, size = 0x9000, scoped, tag = 'internal scratch']
  #allocation2 [shape = 'bf16[1,12,320]{2,1,0:T(8,128)(2,1)}', space=vmem, size = 0x3000, scoped, tag = 'scratch operand']
  %s0 = inlined_call_operand.vmem [shape: bf16[2,4,256], index: 0, kind: input, shape index: {}]
  %s1 = inlined_call_operand.vmem [shape: bf16[8,36], index: 1, kind: input, shape index: {}]
  %s2 = inlined_call_operand.vmem [shape: f32[8,1], index: 2, kind: input, shape index: {}]
  %s3 = inlined_call_operand.vmem [shape: bf16[8,72], index: 3, kind: input, shape index: {}]
  %s4 = inlined_call_operand.vmem [shape: f32[8,1], index: 4, kind: input, shape index: {}]
  %s5 = inlined_call_operand.vmem [shape: bf16[1,288], index: 5, kind: input, shape index: {}]
  %s6 = inlined_call_operand.vmem [shape: bf16[1,288], index: 6, kind: input, shape index: {}]
  %s7 = inlined_call_operand.vmem [shape: f32[2,8,256], index: 7, kind: output, shape index: {}]
  %s8 = sld [smem:[#allocation0]]
  $region65: #{inconv_forward.1} parent=0
    _
  %s10 = ssub.s32 1, %s8
  %s11 = scalar_select 0, %s10, %s8
  loop: start=0, step=1, limit=4
  $region2: #{inconv_forward.1} parent=0 // loop_pre_header
    _
  $region3: #{inconv_forward.1} parent=0 // loop_header
    %s13 = sphi 0, %s17
    %p14 = scmp.ge.s32.totalorder %s13, 4
    %s20 = sphi 0, %s32
    %s21 = sphi 0, %s28
    %s22 = sphi 0, %s20
    %s23 = sphi 0, %s21
    %s24 = sphi 0, %s22
    %s25 = sphi 0, %s23
    %s35 = sphi 0, %s37
    %s38 = sphi 0, %s35
    %s39 = sphi 0, %s38
    %s55 = sphi 0, %s39
    %s59 = sphi 0, %s59
    %s61 = sphi 0, %s59
    %s62 = sphi 0, %s61
    %s76 = sphi 0, %s62
    %s80 = sphi 0, %s80
    %s82 = sphi 0, %s80
    %s83 = sphi 0, %s82
    %s97 = sphi 0, %s83
    %s101 = sphi 0, %s101
    %s103 = sphi 0, %s101
    %s104 = sphi 0, %s103
    %s118 = sphi 0, %s104
    %s122 = sphi 0, %s122
    %s124 = sphi 0, %s122
    %s125 = sphi 0, %s124
    %s139 = sphi 0, %s125
    %s143 = sphi 0, %s143
    %s145 = sphi 0, %s143
    %s146 = sphi 0, %s145
    %s160 = sphi 0, %s146
    %s164 = sphi 0, %s164
    %s166 = sphi 0, %s164
    %s167 = sphi 0, %s166
    %s181 = sphi 0, %s167
    %s189 = sphi 0, %s191
    %s192 = sphi 0, %s189
    %s193 = sphi 0, %s192
    %s209 = sphi 0, %s193
  $region4: #{inconv_forward.1} parent=0 // loop_header_branch
    %16 = sbr.rel (%p14) target = $region8
  $region5: #{inconv_forward.1} parent=0 // loop_body
    %s18 = ssub.s32 %s13, 1
    %s19 = ssub.s32 %s13, 2
    %s26 = sadd.s32 1, %s21
    %p27 = scmp.ge.s32.totalorder %s26, 1
    %s28 = scalar_select %p27, 0, %s26
    %s29 = sadd.s32 1, %s20
    %s30 = scalar_select %p27, %s29, %s20
    %p31 = scmp.ge.s32.totalorder %s30, 2
    %s32 = scalar_select %p31, 0, %s30
    %s33 = ssub.s32 %s20, %s32
    %p34 = scmp.eq.s32.totalorder %s33, 0
    %s36 = sadd.s32 %s35, 1
    %s37 = scalar_select %p34, %s35, %s36
    %p40 = pneg %p34
    %p41 = scmp.eq.s32.totalorder %s13, 1
    %p42 = por %p40, %p41
    %p43 = scmp.ne.s32.totalorder %s35, %s38
    %p44 = scmp.eq.s32.totalorder %s13, 0
    %p45 = por %p43, %p44
    %p46 = scmp.ne.s32.totalorder %s35, %s38
    %p47 = scmp.eq.s32.totalorder %s18, 1
    %p48 = por %p46, %p47
    %p49 = scmp.ne.s32.totalorder %s38, %s39
    %p50 = scmp.eq.s32.totalorder %s18, 0
    %p51 = por %p49, %p50
    %p52 = scmp.ne.s32.totalorder %s38, %s39
    %p53 = scmp.eq.s32.totalorder %s19, 1
    %p54 = por %p52, %p53
    %p56 = scmp.ne.s32.totalorder %s39, %s55
    %p57 = scmp.eq.s32.totalorder %s19, 0
    %p58 = por %p56, %p57
    %s60 = sadd.s32 %s59, 1
    %p63 = scmp.eq.s32.totalorder %s13, 1
    %p64 = scmp.ne.s32.totalorder %s59, %s61
    %p65 = scmp.eq.s32.totalorder %s13, 0
    %p66 = por %p64, %p65
    %p67 = scmp.ne.s32.totalorder %s59, %s61
    %p68 = scmp.eq.s32.totalorder %s18, 1
    %p69 = por %p67, %p68
    %p70 = scmp.ne.s32.totalorder %s61, %s62
    %p71 = scmp.eq.s32.totalorder %s18, 0
    %p72 = por %p70, %p71
    %p73 = scmp.ne.s32.totalorder %s61, %s62
    %p74 = scmp.eq.s32.totalorder %s19, 1
    %p75 = por %p73, %p74
    %p77 = scmp.ne.s32.totalorder %s62, %s76
    %p78 = scmp.eq.s32.totalorder %s19, 0
    %p79 = por %p77, %p78
    %s81 = sadd.s32 %s80, 1
    %p84 = scmp.eq.s32.totalorder %s13, 1
    %p85 = scmp.ne.s32.totalorder %s80, %s82
    %p86 = scmp.eq.s32.totalorder %s13, 0
    %p87 = por %p85, %p86
    %p88 = scmp.ne.s32.totalorder %s80, %s82
    %p89 = scmp.eq.s32.totalorder %s18, 1
    %p90 = por %p88, %p89
    %p91 = scmp.ne.s32.totalorder %s82, %s83
    %p92 = scmp.eq.s32.totalorder %s18, 0
    %p93 = por %p91, %p92
    %p94 = scmp.ne.s32.totalorder %s82, %s83
    %p95 = scmp.eq.s32.totalorder %s19, 1
    %p96 = por %p94, %p95
    %p98 = scmp.ne.s32.totalorder %s83, %s97
    %p99 = scmp.eq.s32.totalorder %s19, 0
    %p100 = por %p98, %p99
    %s102 = sadd.s32 %s101, 1
    %p105 = scmp.eq.s32.totalorder %s13, 1
    %p106 = scmp.ne.s32.totalorder %s101, %s103
    %p107 = scmp.eq.s32.totalorder %s13, 0
    %p108 = por %p106, %p107
    %p109 = scmp.ne.s32.totalorder %s101, %s103
    %p110 = scmp.eq.s32.totalorder %s18, 1
    %p111 = por %p109, %p110
    %p112 = scmp.ne.s32.totalorder %s103, %s104
    %p113 = scmp.eq.s32.totalorder %s18, 0
    %p114 = por %p112, %p113
    %p115 = scmp.ne.s32.totalorder %s103, %s104
    %p116 = scmp.eq.s32.totalorder %s19, 1
    %p117 = por %p115, %p116
    %p119 = scmp.ne.s32.totalorder %s104, %s118
    %p120 = scmp.eq.s32.totalorder %s19, 0
    %p121 = por %p119, %p120
    %s123 = sadd.s32 %s122, 1
    %p126 = scmp.eq.s32.totalorder %s13, 1
    %p127 = scmp.ne.s32.totalorder %s122, %s124
    %p128 = scmp.eq.s32.totalorder %s13, 0
    %p129 = por %p127, %p128
    %p130 = scmp.ne.s32.totalorder %s122, %s124
    %p131 = scmp.eq.s32.totalorder %s18, 1
    %p132 = por %p130, %p131
    %p133 = scmp.ne.s32.totalorder %s124, %s125
    %p134 = scmp.eq.s32.totalorder %s18, 0
    %p135 = por %p133, %p134
    %p136 = scmp.ne.s32.totalorder %s124, %s125
    %p137 = scmp.eq.s32.totalorder %s19, 1
    %p138 = por %p136, %p137
    %p140 = scmp.ne.s32.totalorder %s125, %s139
    %p141 = scmp.eq.s32.totalorder %s19, 0
    %p142 = por %p140, %p141
    %s144 = sadd.s32 %s143, 1
    %p147 = scmp.eq.s32.totalorder %s13, 1
    %p148 = scmp.ne.s32.totalorder %s143, %s145
    %p149 = scmp.eq.s32.totalorder %s13, 0
    %p150 = por %p148, %p149
    %p151 = scmp.ne.s32.totalorder %s143, %s145
    %p152 = scmp.eq.s32.totalorder %s18, 1
    %p153 = por %p151, %p152
    %p154 = scmp.ne.s32.totalorder %s145, %s146
    %p155 = scmp.eq.s32.totalorder %s18, 0
    %p156 = por %p154, %p155
    %p157 = scmp.ne.s32.totalorder %s145, %s146
    %p158 = scmp.eq.s32.totalorder %s19, 1
    %p159 = por %p157, %p158
    %p161 = scmp.ne.s32.totalorder %s146, %s160
    %p162 = scmp.eq.s32.totalorder %s19, 0
    %p163 = por %p161, %p162
    %s165 = sadd.s32 %s164, 1
    %p168 = scmp.eq.s32.totalorder %s13, 1
    %p169 = scmp.ne.s32.totalorder %s164, %s166
    %p170 = scmp.eq.s32.totalorder %s13, 0
    %p171 = por %p169, %p170
    %p172 = scmp.ne.s32.totalorder %s164, %s166
    %p173 = scmp.eq.s32.totalorder %s18, 1
    %p174 = por %p172, %p173
    %p175 = scmp.ne.s32.totalorder %s166, %s167
    %p176 = scmp.eq.s32.totalorder %s18, 0
    %p177 = por %p175, %p176
    %p178 = scmp.ne.s32.totalorder %s166, %s167
    %p179 = scmp.eq.s32.totalorder %s19, 1
    %p180 = por %p178, %p179
    %p182 = scmp.ne.s32.totalorder %s167, %s181
    %p183 = scmp.eq.s32.totalorder %s19, 0
    %p184 = por %p182, %p183
    %s185 = ssub.s32 %s20, %s32
    %s186 = ssub.s32 %s21, %s28
    %s187 = sor.u32 %s185, %s186
    %p188 = scmp.eq.s32.totalorder %s187, 0
    %s190 = sadd.s32 %s189, 1
    %s191 = scalar_select %p188, %s189, %s190
    %p194 = pneg %p188
    %p195 = scmp.eq.s32.totalorder %s13, 1
    %p196 = por %p194, %p195
    %p197 = scmp.ne.s32.totalorder %s189, %s192
    %p198 = scmp.eq.s32.totalorder %s13, 0
    %p199 = por %p197, %p198
    %p200 = scmp.ne.s32.totalorder %s189, %s192
    %p201 = scmp.eq.s32.totalorder %s18, 1
    %p202 = por %p200, %p201
    %p203 = scmp.ne.s32.totalorder %s192, %s193
    %p204 = scmp.eq.s32.totalorder %s18, 0
    %p205 = por %p203, %p204
    %p206 = scmp.ne.s32.totalorder %s192, %s193
    %p207 = scmp.eq.s32.totalorder %s19, 1
    %p208 = por %p206, %p207
    %p210 = scmp.ne.s32.totalorder %s193, %s209
    %p211 = scmp.eq.s32.totalorder %s19, 0
    %p212 = por %p210, %p211
    %p213 = scmp.le.s32.totalorder 1, %s13
    %p214 = scmp.lt.s32.totalorder %s13, 3
    %p215 = pnand %p213, %p214
    %p216 = pneg %p215
    // Predicated region
    $region9: #{inconv_forward.1} parent=5 // pred_check
      _
    $region10: #{inconv_forward.1} parent=5 // pred_check_branch
      %218 = sbr.rel (%p215) target = $region12
    $region11: #{inconv_forward.1} parent=5 // pred_region
      %s219 = ssub.s32 %s13, 1
      // Predicated region
      $region13: #{inconv_forward.1} parent=11 // pred_check
        %p220 = pneg %p72
      $region14: #{inconv_forward.1} parent=11 // pred_check_branch
        %222 = sbr.rel (%p220) target = $region16
      $region15: #{inconv_forward.1} parent=11 // pred_region
        _
      $region16: #{inconv_forward.1} parent=11 // pred_fallthru
        _
      // Predicated region
      $region17: #{inconv_forward.1} parent=11 // pred_check
        %p223 = pneg %p93
      $region18: #{inconv_forward.1} parent=11 // pred_check_branch
        %225 = sbr.rel (%p223) target = $region20
      $region19: #{inconv_forward.1} parent=11 // pred_region
        _
      $region20: #{inconv_forward.1} parent=11 // pred_fallthru
        _
      // Predicated region
      $region21: #{inconv_forward.1} parent=11 // pred_check
        %p226 = pneg %p114
      $region22: #{inconv_forward.1} parent=11 // pred_check_branch
        %228 = sbr.rel (%p226) target = $region24
      $region23: #{inconv_forward.1} parent=11 // pred_region
        _
      $region24: #{inconv_forward.1} parent=11 // pred_fallthru
        _
      // Predicated region
      $region25: #{inconv_forward.1} parent=11 // pred_check
        %p229 = pneg %p135
      $region26: #{inconv_forward.1} parent=11 // pred_check_branch
        %231 = sbr.rel (%p229) target = $region28
      $region27: #{inconv_forward.1} parent=11 // pred_region
        _
      $region28: #{inconv_forward.1} parent=11 // pred_fallthru
        _
      // Predicated region
      $region29: #{inconv_forward.1} parent=11 // pred_check
        %p232 = pneg %p156
      $region30: #{inconv_forward.1} parent=11 // pred_check_branch
        %234 = sbr.rel (%p232) target = $region32
      $region31: #{inconv_forward.1} parent=11 // pred_region
        _
      $region32: #{inconv_forward.1} parent=11 // pred_fallthru
        _
      // Predicated region
      $region33: #{inconv_forward.1} parent=11 // pred_check
        %p235 = pneg %p177
      $region34: #{inconv_forward.1} parent=11 // pred_check_branch
        %237 = sbr.rel (%p235) target = $region36
      $region35: #{inconv_forward.1} parent=11 // pred_region
        _
      $region36: #{inconv_forward.1} parent=11 // pred_fallthru
        _
    $region12: #{inconv_forward.1} parent=5 // pred_fallthru
      _
    %p238 = scmp.lt.s32.totalorder %s13, 2
    // Predicated region
    $region37: #{inconv_forward.1} parent=5 // pred_check
      %p239 = pneg %p238
    $region38: #{inconv_forward.1} parent=5 // pred_check_branch
      %241 = sbr.rel (%p239) target = $region40
    $region39: #{inconv_forward.1} parent=5 // pred_region
      // Predicated region
      $region41: #{inconv_forward.1} parent=39 // pred_check
        %p242 = pneg %p45
      $region42: #{inconv_forward.1} parent=39 // pred_check_branch
        %244 = sbr.rel (%p242) target = $region44
      $region43: #{inconv_forward.1} parent=39 // pred_region
        %p245 = scmp.lt.s32.totalorder %s20, 1
        %s246 = scalar_select %p245, %s20, 1
        %s247 = smul.addr %s246, 2
        %s248 = smul.addr %s247, 2
        %s249 = scalar_lea.vmem %s0, %s248
      $region44: #{inconv_forward.1} parent=39 // pred_fallthru
        _
    $region40: #{inconv_forward.1} parent=5 // pred_fallthru
      _
    %p250 = scmp.le.s32.totalorder 1, %s13
    %p251 = scmp.lt.s32.totalorder %s13, 3
    %p252 = pnand %p250, %p251
    %p253 = pneg %p252
    // Predicated region
    $region45: #{inconv_forward.1} parent=5 // pred_check
      _
    $region46: #{inconv_forward.1} parent=5 // pred_check_branch
      %255 = sbr.rel (%p252) target = $region48
    $region47: #{inconv_forward.1} parent=5 // pred_region
      %s256 = ssub.s32 %s13, 1
      %p257 = scmp.lt.s32.totalorder %s22, 1
      %s258 = scalar_select %p257, %s22, 1
      %s259 = smul.addr %s258, 2
      %s260 = smul.addr %s259, 2
      %s261 = scalar_lea.vmem %s0, %s260
      %p262 = pneg %p51
      %p263 = pneg %p48
      %p264 = pneg %p72
      %p265 = pneg %p69
      %p266 = pneg %p93
      %p267 = pneg %p90
      %p268 = pneg %p114
      %p269 = pneg %p111
      %p270 = pneg %p135
      %p271 = pneg %p132
      %p272 = pneg %p156
      %p273 = pneg %p153
      %p274 = pneg %p177
      %p275 = pneg %p174
      %p276 = pneg %p205
      %p277 = pneg %p202
      %s278 = smul.u32 2, %s23
      %p279 = scmp.lt.s32.totalorder %s22, 1
      %s280 = scalar_select %p279, %s22, 1
      %p281 = scmp.lt.s32.totalorder %s278, 1
      %s282 = scalar_select %p281, %s278, 1
      %s283 = smul.addr %s280, 2
      %s284 = sadd.s32 %s282, %s283
      %s285 = smul.addr %s284, 8
      %s286 = scalar_lea.vmem %s7, %s285
      %p287 = scmp.lt.s32.totalorder %s22, 1
      %s288 = scalar_select %p287, %s22, 1
      %s289 = smul.addr %s288, 2
      %s290 = smul.addr %s289, 2
      %s291 = scalar_lea.vmem %s0, %s290
      %s292 = smul.u32 2, %s23
      %p293 = scmp.lt.s32.totalorder %s22, 1
      %s294 = scalar_select %p293, %s22, 1
      %p295 = scmp.lt.s32.totalorder %s292, 1
      %s296 = scalar_select %p295, %s292, 1
      %s297 = smul.addr %s294, 2
      %s298 = sadd.s32 %s296, %s297
      %s299 = smul.addr %s298, 8
      %s300 = scalar_lea.vmem %s7, %s299
      %s301 = smul.u32 2, %s23
      %p303 = scmp.eq.s32.totalorder %s23, 0
      // Predicated region
      $region49: #{inconv_forward.1} parent=47 // pred_check
        %p304 = pneg %p303
      $region50: #{inconv_forward.1} parent=47 // pred_check_branch
        %306 = sbr.rel (%p304) target = $region52
      $region51: #{inconv_forward.1} parent=47 // pred_region
        %v307 = vld [vmem:[%s291] sm:$0xf]
        %v308 = vld [vmem:[%s5] sm:$0x3]
        %v309 = vld [vmem:[%s6] sm:$0x3]
        %311 = vst [vmem:[#allocation1] ss:$4 sm:$0xff] %v307
        %v312 = vld.sshfl [vmem:[#allocation1] sm:$0xff pattern:$0x73625140]
        %v314 = vld.sshfl [vmem:[#allocation1 + $0x8] sm:$0xff pattern:$0x73625140]
        %316 = vrot.lane.b32.xlu0 %v312, 1
        %v317 = vpop.permute.xlu0 %316
        %318 = vrot.lane.b32.xlu0 %v314, 1
        %v319 = vpop.permute.xlu0 %318
        %vm320 = vcmask 7168
        %v321 = vsel %vm320, %v317, %v319
        %vm323 = vcmask 7168
        %v326 = vsel %vm323, 0, %v317
        %329 = vst [vmem:[#allocation1] ss:$9 sm:$0xff] %v308
        %v330 = vld [vmem:[#allocation1] sm:$0xff]
        %v331 = vld [vmem:[#allocation1 + $0x9] sm:$0xff]
        %v332 = vpack.i.b16 %v330, %v330
        %v334 = vperm.slane %v332, 0
        %v335 = vpack.i.b16 %v331, %v331
        %v337 = vperm.slane %v335, 0
        %v338 = vunpack.c.l.bf16 %v326
        %v339 = vunpack.c.l.bf16 %v321
        %v340 = vunpack.c.l.bf16 %v334
        %v341 = vunpack.c.l.bf16 %v337
        %v342 = vmul.f32 %v338, %v340
        %v343 = vmul.f32 %v339, %v341
        %v344 = vpack.c.bf16 %v343, %v342
        %345 = vst [vmem:[#allocation1] ss:$4 sm:$0xff] %v307
        %v346 = vld.sshfl [vmem:[#allocation1] sm:$0xff pattern:$0x73625140]
        %v348 = vld.sshfl [vmem:[#allocation1 + $0x8] sm:$0xff pattern:$0x73625140]
        %350 = vrot.lane.b32.xlu0 %v346, 127
        %v351 = vpop.permute.xlu0 %350
        %352 = vrot.lane.b32.xlu0 %v348, 127
        %v353 = vpop.permute.xlu0 %352
        %vm354 = vcmask 1039360
        %v355 = vsel %vm354, %v351, %v353
        %vm357 = vcmask 1039360
        %v359 = vsel %vm357, %v353, 0
        %362 = vst [vmem:[#allocation1] ss:$9 sm:$0xff] %v309
        %v363 = vld [vmem:[#allocation1] sm:$0xff]
        %v364 = vld [vmem:[#allocation1 + $0x9] sm:$0xff]
        %v365 = vpack.i.b16 %v363, %v363
        %v367 = vperm.slane %v365, 0
        %v368 = vpack.i.b16 %v364, %v364
        %v370 = vperm.slane %v368, 0
        %v371 = vunpack.c.l.bf16 %v355
        %v372 = vunpack.c.l.bf16 %v359
        %v373 = vunpack.c.l.bf16 %v367
        %v374 = vunpack.c.l.bf16 %v370
        %v375 = vmul.f32 %v371, %v373
        %v376 = vmul.f32 %v372, %v374
        %v377 = vpack.c.bf16 %v376, %v375
        %v379 = vunpack.c.l.b16 %v344
        %v380 = vunpack.c.h.b16 %v344
        %v381 = vpack.c.b16 %v379, %v379
        %v382 = vpack.c.b16 %v380, %v380
        %s383 = scalar_lea.vmem [#allocation1], 1
        %384 = vst [vmem:[%s383] ss:$4 sm:$0xff] %v307
        %v385 = vld.sshfl [vmem:[#allocation1] sm:$0xff pattern:$0x73625140]
        %v386 = vld.sshfl [vmem:[#allocation1 + $0x8] sm:$0xff pattern:$0x73625140]
        %v388 = vunpack.c.l.b16 %v377
        %v389 = vunpack.c.h.b16 %v377
        %v390 = vpack.c.b16 %v388, %v388
        %v391 = vpack.c.b16 %v389, %v389
        %vm392 = vcmask 1041408
        %v394 = vsel %vm392, %v381, %v385
        %v396 = vsel %vm392, %v382, %v386
        %vm397 = vcmask 1043456
        %v399 = vsel %vm397, %v394, %v390
        %v401 = vsel %vm397, %v396, %v391
        %vm402 = vcmask 257024
        %403 = vst.msk [vmem:[#allocation2] sm:$0xf] %vm402, 0
        %vm404 = vcmask 254976
        %405 = vst.msk [vmem:[#allocation2 + $0xc] sm:$0x3] %vm404, 0
        %vm406 = vcmask 519424
        %407 = vst.msk [vmem:[#allocation2 + $0x8] sm:$0xf] %vm406, 0
        %vm408 = vcmask 517376
        %409 = vst.msk [vmem:[#allocation2 + $0x14] sm:$0x3] %vm408, 0
        %v412 = vunpack.c.l.b16 %v399
        %v413 = vunpack.c.l.b16 %v401
        %v414 = vunpack.c.h.b16 %v399
        %v415 = vunpack.c.h.b16 %v401
        %v416 = vpack.c.b16 %v413, %v412
        %v417 = vpack.c.b16 %v415, %v414
        %418 = vrot.lane.b32.xlu0 %v416, 32
        %v419 = vpop.permute.xlu0 %418
        %420 = vrot.lane.b32.xlu0 %v417, 32
        %v421 = vpop.permute.xlu0 %420
        %v422 = vrot.slane %v419, 4
        %v423 = vrot.slane %v421, 4
        %vm424 = vcmask 261120
        %v425 = vsel %vm424, %v422, %v419
        %v426 = vsel %vm424, %v423, %v421
        %vm431 = vcmask 1043712
        %vm432 = vcmask 1047556
        %vm433 = vmor %vm432, %vm431
        %434 = vst.msk [vmem:[#allocation2] sm:$0xff] %vm433, %v425
        %435 = vst.msk [vmem:[#allocation2 + $0x8] sm:$0xf] %vm402, %v422
        %vm436 = vcmask 1041664
        %vm437 = vcmask 1045508
        %vm438 = vmor %vm437, %vm436
        %439 = vst.msk [vmem:[#allocation2 + $0xc] sm:$0x33] %vm438, %v426
        %440 = vst.msk [vmem:[#allocation2 + $0x14] sm:$0x3] %vm404, %v423
      $region52: #{inconv_forward.1} parent=47 // pred_fallthru
        _
      %s441 = smul.u32 %s23, 6
      %s442 = smul.addr %s441, 4
      %s443 = scalar_lea.vmem [#allocation2], %s442
      %v444 = vld [vmem:[%s443] sm:$0xff]
      %v445 = vld [vmem:[%s443 + $0x8] sm:$0xf]
      %v446 = vld [vmem:[%s443 + $0xc] sm:$0x33]
      %v447 = vld [vmem:[%s443 + $0x14] sm:$0x3]
      %v448 = vld [vmem:[%s1] sm:$0xf]
      %v450 = vunpack.c.l.b16 %v448
      %v451 = vpack.c.b16 %v450, %v450
      %452 = vrot.lane.b32.xlu0 %v451, 116
      %v453 = vpop.permute.xlu0 %452
      %v458 = vunpack.c.l.b16 %v444
      %v459 = vunpack.c.h.b16 %v444
      %v460 = vunpack.c.l.b16 %v445
      %v461 = vunpack.c.l.b16 %v446
      %v462 = vunpack.c.h.b16 %v446
      %v463 = vunpack.c.l.b16 %v447
      %v464 = vpack.c.b16 %v461, %v458
      %v465 = vpack.c.b16 %v462, %v459
      %v466 = vpack.c.b16 %v463, %v460
      %467 = vrot.lane.b32.xlu0 %v464, 112
      %v468 = vpop.permute.xlu0 %467
      %469 = vrot.lane.b32.xlu0 %v465, 112
      %v470 = vpop.permute.xlu0 %469
      %471 = vrot.lane.b32.xlu0 %v466, 112
      %v472 = vpop.permute.xlu0 %471
      %vm473 = vcmask 916480
      %v474 = vsel %vm473, %v468, %v470
      %v475 = vsel %vm473, %v470, %v472
      %vm476 = vcmask 97280
      %v478 = vsel %vm476, %v453, 0
      %vm480 = vcmask 1045504
      %v482 = vsel %vm480, %v474, 0
      %v485 = vsel %vm480, %v475, 0
      %v488 = vsel %vm480, %v472, 0
      %490 = vmatpush.bf16.msra.mxu0 0
      %491 = vmatpush.bf16.msra.mxu0 0
      %492 = vmatpush.bf16.msra.mxu0 0
      %493 = vmatpush.bf16.msra.mxu0 0
      %494 = vmatpush.bf16.msra.mxu0 0
      %495 = vmatpush.bf16.msra.mxu0 0
      %496 = vmatpush.bf16.msra.mxu0 0
      %497 = vmatpush.bf16.msra.mxu0 %v482
      %498 = vmatmul.bf16.gmra.mxu0 %v478
      %v499 = vpop.f32.mrf.mxu0
      %v500 = vadd.f32 0.0, %v499
      %v501 = vpop.f32.mrf.mxu0
      %502 = vdwg.mxu0
      %503 = vmatpush.bf16.msra.mxu0 0
      %504 = vmatpush.bf16.msra.mxu0 0
      %505 = vmatpush.bf16.msra.mxu0 0
      %506 = vmatpush.bf16.msra.mxu0 0
      %507 = vmatpush.bf16.msra.mxu0 0
      %508 = vmatpush.bf16.msra.mxu0 0
      %509 = vmatpush.bf16.msra.mxu0 0
      %510 = vmatpush.bf16.msra.mxu0 %v485
      %511 = vmatmul.bf16.gmra.mxu0 %v478
      %v512 = vpop.f32.mrf.mxu0
      %v513 = vadd.f32 0.0, %v512
      %v514 = vpop.f32.mrf.mxu0
      %515 = vdwg.mxu0
      %516 = vmatpush.bf16.msra.mxu0 0
      %517 = vmatpush.bf16.msra.mxu0 0
      %518 = vmatpush.bf16.msra.mxu0 0
      %519 = vmatpush.bf16.msra.mxu0 0
      %520 = vmatpush.bf16.msra.mxu0 0
      %521 = vmatpush.bf16.msra.mxu0 0
      %522 = vmatpush.bf16.msra.mxu0 0
      %523 = vmatpush.bf16.msra.mxu0 %v488
      %524 = vmatmul.bf16.gmra.mxu0 %v478
      %v525 = vpop.f32.mrf.mxu0
      %v526 = vadd.f32 0.0, %v525
      %v527 = vpop.f32.mrf.mxu0
      %528 = vdwg.mxu0
      %v530 = vsel %vm476, %v448, 0
      %v533 = vsel %vm480, %v464, 0
      %v536 = vsel %vm480, %v465, 0
      %v539 = vsel %vm480, %v466, 0
      %541 = vmatpush.bf16.msra.mxu0 0
      %542 = vmatpush.bf16.msra.mxu0 0
      %543 = vmatpush.bf16.msra.mxu0 0
      %544 = vmatpush.bf16.msra.mxu0 0
      %545 = vmatpush.bf16.msra.mxu0 0
      %546 = vmatpush.bf16.msra.mxu0 0
      %547 = vmatpush.bf16.msra.mxu0 0
      %548 = vmatpush.bf16.msra.mxu0 %v533
      %549 = vmatmul.bf16.gmra.mxu0 %v530
      %v550 = vpop.f32.mrf.mxu0
      %v551 = vadd.f32 %v500, %v550
      %v552 = vpop.f32.mrf.mxu0
      %553 = vdwg.mxu0
      %554 = vmatpush.bf16.msra.mxu0 0
      %555 = vmatpush.bf16.msra.mxu0 0
      %556 = vmatpush.bf16.msra.mxu0 0
      %557 = vmatpush.bf16.msra.mxu0 0
      %558 = vmatpush.bf16.msra.mxu0 0
      %559 = vmatpush.bf16.msra.mxu0 0
      %560 = vmatpush.bf16.msra.mxu0 0
      %561 = vmatpush.bf16.msra.mxu0 %v536
      %562 = vmatmul.bf16.gmra.mxu0 %v530
      %v563 = vpop.f32.mrf.mxu0
      %v564 = vadd.f32 %v513, %v563
      %v565 = vpop.f32.mrf.mxu0
      %566 = vdwg.mxu0
      %567 = vmatpush.bf16.msra.mxu0 0
      %568 = vmatpush.bf16.msra.mxu0 0
      %569 = vmatpush.bf16.msra.mxu0 0
      %570 = vmatpush.bf16.msra.mxu0 0
      %571 = vmatpush.bf16.msra.mxu0 0
      %572 = vmatpush.bf16.msra.mxu0 0
      %573 = vmatpush.bf16.msra.mxu0 0
      %574 = vmatpush.bf16.msra.mxu0 %v539
      %575 = vmatmul.bf16.gmra.mxu0 %v530
      %v576 = vpop.f32.mrf.mxu0
      %v577 = vadd.f32 %v526, %v576
      %v578 = vpop.f32.mrf.mxu0
      %579 = vdwg.mxu0
      %580 = vrot.lane.b32.xlu0 %v451, 104
      %v581 = vpop.permute.xlu0 %580
      %582 = vrot.lane.b32.xlu0 %v464, 96
      %v583 = vpop.permute.xlu0 %582
      %584 = vrot.lane.b32.xlu0 %v465, 96
      %v585 = vpop.permute.xlu0 %584
      %586 = vrot.lane.b32.xlu0 %v466, 96
      %v587 = vpop.permute.xlu0 %586
      %vm588 = vcmask 785408
      %v589 = vsel %vm588, %v583, %v585
      %v590 = vsel %vm588, %v585, %v587
      %v592 = vsel %vm476, %v581, 0
      %v595 = vsel %vm480, %v589, 0
      %v598 = vsel %vm480, %v590, 0
      %v601 = vsel %vm480, %v587, 0
      %603 = vmatpush.bf16.msra.mxu0 0
      %604 = vmatpush.bf16.msra.mxu0 0
      %605 = vmatpush.bf16.msra.mxu0 0
      %606 = vmatpush.bf16.msra.mxu0 0
      %607 = vmatpush.bf16.msra.mxu0 0
      %608 = vmatpush.bf16.msra.mxu0 0
      %609 = vmatpush.bf16.msra.mxu0 0
      %610 = vmatpush.bf16.msra.mxu0 %v595
      %611 = vmatmul.bf16.gmra.mxu0 %v592
      %v612 = vpop.f32.mrf.mxu0
      %v613 = vadd.f32 0.0, %v612
      %v614 = vpop.f32.mrf.mxu0
      %615 = vdwg.mxu0
      %616 = vmatpush.bf16.msra.mxu0 0
      %617 = vmatpush.bf16.msra.mxu0 0
      %618 = vmatpush.bf16.msra.mxu0 0
      %619 = vmatpush.bf16.msra.mxu0 0
      %620 = vmatpush.bf16.msra.mxu0 0
      %621 = vmatpush.bf16.msra.mxu0 0
      %622 = vmatpush.bf16.msra.mxu0 0
      %623 = vmatpush.bf16.msra.mxu0 %v598
      %624 = vmatmul.bf16.gmra.mxu0 %v592
      %v625 = vpop.f32.mrf.mxu0
      %v626 = vadd.f32 0.0, %v625
      %v627 = vpop.f32.mrf.mxu0
      %628 = vdwg.mxu0
      %629 = vmatpush.bf16.msra.mxu0 0
      %630 = vmatpush.bf16.msra.mxu0 0
      %631 = vmatpush.bf16.msra.mxu0 0
      %632 = vmatpush.bf16.msra.mxu0 0
      %633 = vmatpush.bf16.msra.mxu0 0
      %634 = vmatpush.bf16.msra.mxu0 0
      %635 = vmatpush.bf16.msra.mxu0 0
      %636 = vmatpush.bf16.msra.mxu0 %v601
      %637 = vmatmul.bf16.gmra.mxu0 %v592
      %v638 = vpop.f32.mrf.mxu0
      %v639 = vadd.f32 0.0, %v638
      %v640 = vpop.f32.mrf.mxu0
      %641 = vdwg.mxu0
      %v642 = vadd.f32 %v551, %v613
      %v643 = vadd.f32 %v564, %v626
      %v644 = vadd.f32 %v577, %v639
      %v645 = vld [vmem:[%s2] sm:$0xff]
      %647 = vset.pattern.permute.xlu0 0
      %648 = vperm.xlu0 %647, %v645
      %v649 = vpop.permute.xlu0 %648
      %v651 = vadd.f32 %v642, %v649
      %v652 = vadd.f32 %v643, %v649
      %v653 = vadd.f32 %v644, %v649
      %v654 = vmax.f32 %v651, 0.0
      %v655 = vmax.f32 %v652, 0.0
      %v656 = vmax.f32 %v653, 0.0
      %s657 = smul.u32 %s23, 16
      %v658 = vlaneseq
      %v659 = vand.u32 %v658, 127
      %v660 = vadd.s32 %v659, 128
      %v661 = vadd.s32 %v659, 256
      %s662 = ssub.s32 1, %s657
      %s663 = smul.u32 %s662, 16
      %v664 = vstv %s663
      %vm665 = vcmp.ge.s32.totalorder %v659, %v664
      %vm666 = vcmp.ge.s32.totalorder %v660, %v664
      %vm667 = vcmp.ge.s32.totalorder %v661, %v664
      %s668 = ssub.s32 17, %s657
      %s669 = smul.u32 %s668, 16
      %v670 = vstv %s669
      %vm671 = vcmp.lt.s32.totalorder %v659, %v670
      %vm672 = vcmp.lt.s32.totalorder %v660, %v670
      %vm673 = vcmp.lt.s32.totalorder %v661, %v670
      %vm674 = vmand %vm665, %vm671
      %vm675 = vmand %vm666, %vm672
      %vm676 = vmand %vm667, %vm673
      %v677 = vsel %vm674, 1, 0
      %v678 = vsel %vm675, 1, 0
      %v679 = vsel %vm676, 1, 0
      %vm680 = vcmp.eq.s32.totalorder %v677, 1
      %vm681 = vcmp.eq.s32.totalorder %v678, 1
      %vm682 = vcmp.eq.s32.totalorder %v679, 1
      %v683 = vsel %vm680, %v654, 0.0
      %v684 = vsel %vm681, %v655, 0.0
      %v685 = vsel %vm682, %v656, 0.0
      %v686 = vpack.c.bf16 %v684, %v683
      %v687 = vpack.c.bf16 %v685, %v685
      %v688 = vld [vmem:[%s5] sm:$0x7]
      %v689 = vld [vmem:[%s6] sm:$0x7]
      %v692 = vunpack.c.l.b16 %v686
      %v693 = vunpack.c.h.b16 %v686
      %v694 = vunpack.c.l.b16 %v687
      %v695 = vpack.c.b16 %v692, %v692
      %v696 = vpack.c.b16 %v693, %v693
      %v697 = vpack.c.b16 %v694, %v694
      %698 = vrot.lane.b32.xlu0 %v695, 1
      %v699 = vpop.permute.xlu0 %698
      %700 = vrot.lane.b32.xlu0 %v696, 1
      %v701 = vpop.permute.xlu0 %700
      %702 = vrot.lane.b32.xlu0 %v697, 1
      %v703 = vpop.permute.xlu0 %702
      %vm704 = vcmask 7168
      %v705 = vsel %vm704, %v699, %v701
      %v706 = vsel %vm704, %v701, %v703
      %vm709 = vcmask 7168
      %v712 = vsel %vm709, 0, %v699
      %715 = vst [vmem:[#allocation1] ss:$9 sm:$0xff] %v688
      %v716 = vld [vmem:[#allocation1] sm:$0xff]
      %v717 = vld [vmem:[#allocation1 + $0x9] sm:$0xff]
      %v718 = vld [vmem:[#allocation1 + $0x12] sm:$0xff]
      %v719 = vpack.i.b16 %v716, %v716
      %v721 = vperm.slane %v719, 0
      %v722 = vpack.i.b16 %v717, %v717
      %v724 = vperm.slane %v722, 0
      %v725 = vpack.i.b16 %v718, %v718
      %v727 = vperm.slane %v725, 0
      %v728 = vunpack.c.l.bf16 %v712
      %v729 = vunpack.c.l.bf16 %v705
      %v730 = vunpack.c.l.bf16 %v706
      %v731 = vunpack.c.l.bf16 %v721
      %v732 = vunpack.c.l.bf16 %v724
      %v733 = vunpack.c.l.bf16 %v727
      %v734 = vmul.f32 %v728, %v731
      %v735 = vmul.f32 %v729, %v732
      %v736 = vmul.f32 %v730, %v733
      %v737 = vpack.c.bf16 %v735, %v734
      %v738 = vpack.c.bf16 %v736, %v736
      %739 = vrot.lane.b32.xlu0 %v695, 127
      %v740 = vpop.permute.xlu0 %739
      %741 = vrot.lane.b32.xlu0 %v696, 127
      %v742 = vpop.permute.xlu0 %741
      %743 = vrot.lane.b32.xlu0 %v697, 127
      %v744 = vpop.permute.xlu0 %743
      %vm745 = vcmask 1039360
      %v746 = vsel %vm745, %v740, %v742
      %v747 = vsel %vm745, %v742, %v744
      %vm750 = vcmask 252928
      %v752 = vsel %vm750, %v744, 0
      %755 = vst [vmem:[#allocation1] ss:$9 sm:$0xff] %v689
      %v756 = vld [vmem:[#allocation1] sm:$0xff]
      %v757 = vld [vmem:[#allocation1 + $0x9] sm:$0xff]
      %v758 = vld [vmem:[#allocation1 + $0x12] sm:$0xff]
      %v759 = vpack.i.b16 %v756, %v756
      %v761 = vperm.slane %v759, 0
      %v762 = vpack.i.b16 %v757, %v757
      %v764 = vperm.slane %v762, 0
      %v765 = vpack.i.b16 %v758, %v758
      %v767 = vperm.slane %v765, 0
      %v768 = vunpack.c.l.bf16 %v746
      %v769 = vunpack.c.l.bf16 %v747
      %v770 = vunpack.c.l.bf16 %v752
      %v771 = vunpack.c.l.bf16 %v761
      %v772 = vunpack.c.l.bf16 %v764
      %v773 = vunpack.c.l.bf16 %v767
      %v774 = vmul.f32 %v768, %v771
      %v775 = vmul.f32 %v769, %v772
      %v776 = vmul.f32 %v770, %v773
      %v777 = vpack.c.bf16 %v775, %v774
      %v778 = vpack.c.bf16 %v776, %v776
      %v781 = vunpack.c.l.b16 %v737
      %v782 = vunpack.c.h.b16 %v737
      %v783 = vunpack.c.l.b16 %v738
      %v784 = vpack.c.b16 %v781, %v781
      %v785 = vpack.c.b16 %v782, %v782
      %v786 = vpack.c.b16 %v783, %v783
      %v789 = vunpack.c.l.b16 %v777
      %v790 = vunpack.c.h.b16 %v777
      %v791 = vunpack.c.l.b16 %v778
      %v792 = vpack.c.b16 %v789, %v789
      %v793 = vpack.c.b16 %v790, %v790
      %v794 = vpack.c.b16 %v791, %v791
      %vm795 = vcmask 1043456
      %v798 = vsel %vm795, %v784, %v695
      %v802 = vsel %vm795, %v785, %v696
      %v806 = vsel %vm795, %v786, %v697
      %v807 = vld [vmem:[%s3] sm:$0xf]
      %v809 = vunpack.c.l.b16 %v807
      %v810 = vpack.c.b16 %v809, %v809
      %811 = vrot.lane.b32.xlu0 %v810, 104
      %v812 = vpop.permute.xlu0 %811
      %816 = vrot.lane.b32.xlu0 %v798, 112
      %v817 = vpop.permute.xlu0 %816
      %818 = vrot.lane.b32.xlu0 %v802, 112
      %v819 = vpop.permute.xlu0 %818
      %820 = vrot.lane.b32.xlu0 %v806, 112
      %v821 = vpop.permute.xlu0 %820
      %822 = vrot.lane.b32.xlu0 %v792, 112
      %v823 = vpop.permute.xlu0 %822
      %824 = vrot.lane.b32.xlu0 %v793, 112
      %v825 = vpop.permute.xlu0 %824
      %826 = vrot.lane.b32.xlu0 %v794, 112
      %v827 = vpop.permute.xlu0 %826
      %v828 = vsel %vm473, %v817, %v819
      %v829 = vsel %vm473, %v819, %v821
      %v830 = vsel %vm473, %v823, %v825
      %v831 = vsel %vm473, %v825, %v827
      %vm834 = vcmask 195584
      %v836 = vsel %vm834, %v812, 0
      %v839 = vsel %vm795, %v830, 0
      %v842 = vsel %vm795, %v831, 0
      %844 = vmatpush.bf16.msra.mxu0 0
      %845 = vmatpush.bf16.msra.mxu0 0
      %846 = vmatpush.bf16.msra.mxu0 0
      %847 = vmatpush.bf16.msra.mxu0 0
      %848 = vmatpush.bf16.msra.mxu0 0
      %849 = vmatpush.bf16.msra.mxu0 0
      %850 = vmatpush.bf16.msra.mxu0 %v839
      %851 = vmatpush.bf16.msra.mxu0 %v828
      %852 = vmatmul.bf16.gmra.mxu0 %v836
      %v853 = vpop.f32.mrf.mxu0
      %v854 = vadd.f32 0.0, %v853
      %v855 = vpop.f32.mrf.mxu0
      %856 = vdwg.mxu0
      %857 = vmatpush.bf16.msra.mxu0 0
      %858 = vmatpush.bf16.msra.mxu0 0
      %859 = vmatpush.bf16.msra.mxu0 0
      %860 = vmatpush.bf16.msra.mxu0 0
      %861 = vmatpush.bf16.msra.mxu0 0
      %862 = vmatpush.bf16.msra.mxu0 0
      %863 = vmatpush.bf16.msra.mxu0 %v842
      %864 = vmatpush.bf16.msra.mxu0 %v829
      %865 = vmatmul.bf16.gmra.mxu0 %v836
      %v866 = vpop.f32.mrf.mxu0
      %v867 = vadd.f32 0.0, %v866
      %v868 = vpop.f32.mrf.mxu0
      %869 = vdwg.mxu0
      %v871 = vsel %vm834, %v807, 0
      %v874 = vsel %vm795, %v792, 0
      %v877 = vsel %vm795, %v793, 0
      %879 = vmatpush.bf16.msra.mxu0 0
      %880 = vmatpush.bf16.msra.mxu0 0
      %881 = vmatpush.bf16.msra.mxu0 0
      %882 = vmatpush.bf16.msra.mxu0 0
      %883 = vmatpush.bf16.msra.mxu0 0
      %884 = vmatpush.bf16.msra.mxu0 0
      %885 = vmatpush.bf16.msra.mxu0 %v874
      %886 = vmatpush.bf16.msra.mxu0 %v798
      %887 = vmatmul.bf16.gmra.mxu0 %v871
      %v888 = vpop.f32.mrf.mxu0
      %v889 = vadd.f32 %v854, %v888
      %v890 = vpop.f32.mrf.mxu0
      %891 = vdwg.mxu0
      %892 = vmatpush.bf16.msra.mxu0 0
      %893 = vmatpush.bf16.msra.mxu0 0
      %894 = vmatpush.bf16.msra.mxu0 0
      %895 = vmatpush.bf16.msra.mxu0 0
      %896 = vmatpush.bf16.msra.mxu0 0
      %897 = vmatpush.bf16.msra.mxu0 0
      %898 = vmatpush.bf16.msra.mxu0 %v877
      %899 = vmatpush.bf16.msra.mxu0 %v802
      %900 = vmatmul.bf16.gmra.mxu0 %v871
      %v901 = vpop.f32.mrf.mxu0
      %v902 = vadd.f32 %v867, %v901
      %v903 = vpop.f32.mrf.mxu0
      %904 = vdwg.mxu0
      %905 = vrot.lane.b32.xlu0 %v810, 80
      %v906 = vpop.permute.xlu0 %905
      %907 = vrot.lane.b32.xlu0 %v798, 96
      %v908 = vpop.permute.xlu0 %907
      %909 = vrot.lane.b32.xlu0 %v802, 96
      %v910 = vpop.permute.xlu0 %909
      %911 = vrot.lane.b32.xlu0 %v806, 96
      %v912 = vpop.permute.xlu0 %911
      %913 = vrot.lane.b32.xlu0 %v792, 96
      %v914 = vpop.permute.xlu0 %913
      %915 = vrot.lane.b32.xlu0 %v793, 96
      %v916 = vpop.permute.xlu0 %915
      %917 = vrot.lane.b32.xlu0 %v794, 96
      %v918 = vpop.permute.xlu0 %917
      %v919 = vsel %vm588, %v908, %v910
      %v920 = vsel %vm588, %v910, %v912
      %v921 = vsel %vm588, %v914, %v916
      %v922 = vsel %vm588, %v916, %v918
      %v926 = vsel %vm834, %v906, 0
      %v929 = vsel %vm795, %v921, 0
      %v932 = vsel %vm795, %v922, 0
      %934 = vmatpush.bf16.msra.mxu0 0
      %935 = vmatpush.bf16.msra.mxu0 0
      %936 = vmatpush.bf16.msra.mxu0 0
      %937 = vmatpush.bf16.msra.mxu0 0
      %938 = vmatpush.bf16.msra.mxu0 0
      %939 = vmatpush.bf16.msra.mxu0 0
      %940 = vmatpush.bf16.msra.mxu0 %v929
      %941 = vmatpush.bf16.msra.mxu0 %v919
      %942 = vmatmul.bf16.gmra.mxu0 %v926
      %v943 = vpop.f32.mrf.mxu0
      %v944 = vadd.f32 0.0, %v943
      %v945 = vpop.f32.mrf.mxu0
      %946 = vdwg.mxu0
      %947 = vmatpush.bf16.msra.mxu0 0
      %948 = vmatpush.bf16.msra.mxu0 0
      %949 = vmatpush.bf16.msra.mxu0 0
      %950 = vmatpush.bf16.msra.mxu0 0
      %951 = vmatpush.bf16.msra.mxu0 0
      %952 = vmatpush.bf16.msra.mxu0 0
      %953 = vmatpush.bf16.msra.mxu0 %v932
      %954 = vmatpush.bf16.msra.mxu0 %v920
      %955 = vmatmul.bf16.gmra.mxu0 %v926
      %v956 = vpop.f32.mrf.mxu0
      %v957 = vadd.f32 0.0, %v956
      %v958 = vpop.f32.mrf.mxu0
      %959 = vdwg.mxu0
      %v960 = vadd.f32 %v889, %v944
      %v961 = vadd.f32 %v902, %v957
      %v962 = vld [vmem:[%s4] sm:$0xff]
      %964 = vset.pattern.permute.xlu0 0
      %965 = vperm.xlu0 %964, %v962
      %v966 = vpop.permute.xlu0 %965
      %v968 = vadd.f32 %v960, %v966
      %v969 = vadd.f32 %v961, %v966
      %v970 = vmax.f32 %v968, 0.0
      %v971 = vmax.f32 %v969, 0.0
      %972 = vst [vmem:[%s300] sm:$0xff] %v970
      %973 = vst [vmem:[%s300 + $0x8] sm:$0xff] %v971
      %s974 = smul.u32 2, %s23
      %p975 = scmp.lt.s32.totalorder %s22, 1
      %s976 = scalar_select %p975, %s22, 1
      %p977 = scmp.lt.s32.totalorder %s974, 1
      %s978 = scalar_select %p977, %s974, 1
      %s979 = smul.addr %s976, 2
      %s980 = sadd.s32 %s978, %s979
      %s981 = smul.addr %s980, 8
      %s982 = scalar_lea.vmem %s7, %s981
      // Predicated region
      $region53: #{inconv_forward.1} parent=47 // pred_check
        %p983 = pneg %p202
      $region54: #{inconv_forward.1} parent=47 // pred_check_branch
        %985 = sbr.rel (%p983) target = $region56
      $region55: #{inconv_forward.1} parent=47 // pred_region
        %s986 = smul.u32 2, %s23
      $region56: #{inconv_forward.1} parent=47 // pred_fallthru
        _
    $region48: #{inconv_forward.1} parent=5 // pred_fallthru
      _
    %p987 = scmp.le.s32.totalorder 2, %s13
    // Predicated region
    $region57: #{inconv_forward.1} parent=5 // pred_check
      %p988 = pneg %p987
    $region58: #{inconv_forward.1} parent=5 // pred_check_branch
      %990 = sbr.rel (%p988) target = $region60
    $region59: #{inconv_forward.1} parent=5 // pred_region
      %s991 = ssub.s32 %s13, 2
      // Predicated region
      $region61: #{inconv_forward.1} parent=59 // pred_check
        %p992 = pneg %p208
      $region62: #{inconv_forward.1} parent=59 // pred_check_branch
        %994 = sbr.rel (%p992) target = $region64
      $region63: #{inconv_forward.1} parent=59 // pred_region
        %s995 = smul.u32 2, %s25
        %p996 = scmp.lt.s32.totalorder %s24, 1
        %s997 = scalar_select %p996, %s24, 1
        %p998 = scmp.lt.s32.totalorder %s995, 1
        %s999 = scalar_select %p998, %s995, 1
        %s1000 = smul.addr %s997, 2
        %s1001 = sadd.s32 %s999, %s1000
        %s1002 = smul.addr %s1001, 8
        %s1003 = scalar_lea.vmem %s7, %s1002
      $region64: #{inconv_forward.1} parent=59 // pred_fallthru
        _
    $region60: #{inconv_forward.1} parent=5 // pred_fallthru
      _
  $region6: #{inconv_forward.1} parent=0 // loop_footer
    %s17 = sadd.s32 1, %s13
  $region7: #{inconv_forward.1} parent=0 // loop_footer_branch
    %12 = sbr.rel target = $region3
  $region8: #{inconv_forward.1} parent=0 // loop_exit
    _

</llo_original>
